<compile_context>
chip_gen: v6e
topology: v6e:2x2x1
jax: 0.10.0
libtpu: 0.0.40
codegen_flags: <defaults>
</compile_context>

<pallas_src>
import jax
import jax.numpy as jnp
from jax.experimental import pallas as pl
from jax.experimental.pallas import tpu as pltpu


def _pick_tile(D, K, N, tn_max=4096, vmem_col_budget=12 * 1024 * 1024):
    """Pick the lane-tile width (multiple of 128, or == N if N fits in one)."""
    # Approx per-lane-column VMEM footprint: double-buffered X/S input tiles
    # plus in-flight intermediates (ax, d2 / sp, d1), all f32.
    per_col_bytes = 8 * (D + K) * 4
    cap = max(128, (vmem_col_budget // per_col_bytes) // 128 * 128)
    tn = int(min(tn_max, cap))
    if N <= tn:
        return N, 1                       # one full-row tile per batch element
    return tn, pl.cdiv(N, tn)             # tn is a multiple of 128 here


def _make_kernel(N, tn, mask_cols):
    def kernel(order_ref, alpha_ref, x_ref, s_ref, dict_ref, a_ref, out_ref):
        """One (batch, lane-tile) grid step.

        order_ref : SMEM (B,) int32   scalar-prefetched batch_order (unused in body)
        alpha_ref : SMEM (1,)  f32
        x_ref     : [1, D, tn]        X[b, :, t*tn : t*tn+tn]
        s_ref     : [1, K, tn]        Sparse_Code[batch_order[b], :, ...]
        dict_ref  : [D, K]            synthesis dictionary (resident)
        a_ref     : [K, D]            analysis operator   (resident)
        out_ref   : [1, tn]           per-column partial loss for this tile
        """
        alpha = alpha_ref[0]
        x = x_ref[0]                                                      # [D, tn]
        s = s_ref[0]                                                      # [K, tn]

        # term 2 first, fully reduced before forming the next residual.
        ax = jnp.dot(a_ref[...], x, preferred_element_type=jnp.float32)   # [K, tn]
        d2 = ax - s
        r2 = jnp.sum(d2 * d2, axis=0, keepdims=True)                      # [1, tn]

        # term 1: ||X - D_syn S||^2
        sp = jnp.dot(dict_ref[...], s, preferred_element_type=jnp.float32)  # [D, tn]
        d1 = x - sp
        r1 = jnp.sum(d1 * d1, axis=0, keepdims=True)                      # [1, tn]

        # term 3: l2,1 group sparsity (per-column l2 norm).
        r3 = jnp.sqrt(jnp.sum(s * s, axis=0, keepdims=True))              # [1, tn]

        result = r1 + alpha * (r2 + r3)

        if mask_cols:  # last lane tile may extend past N: zero those columns
            t = pl.program_id(1)
            col = t * tn + jax.lax.broadcasted_iota(jnp.int32, (1, tn), 1)
            result = jnp.where(col < N, result, 0.0)

        out_ref[...] = result

    return kernel


def sparse_loss(X, sparse_code, synthesis_dict, analysis_w, batch_order,
                *, alpha, tn_max=4096):
    """X: [B, D, N] f32, sparse_code: [M, K, N] f32, synthesis_dict: [D, K],
    analysis_w: [K, D], batch_order: [B] int. Returns scalar f32."""
    B, D, N = X.shape
    M, K, N2 = sparse_code.shape
    assert N2 == N

    tn, n_tiles = _pick_tile(D, K, N, tn_max=tn_max)
    mask_cols = (N % tn) != 0                       # only possible if n_tiles > 1
    lane_dense_out = (tn % 128 == 0) or (B * n_tiles == 1)

    batch_order = batch_order.astype(jnp.int32)
    alpha_arr = jnp.asarray([alpha], dtype=jnp.float32)

    if lane_dense_out:
        out_shape = jax.ShapeDtypeStruct((1, B * n_tiles * tn), jnp.float32)
        out_spec = pl.BlockSpec((1, tn), lambda b, t, order: (0, b * n_tiles + t))
    else:
        # Ragged N with a single tile per batch; fall back to one row per tile.
        out_shape = jax.ShapeDtypeStruct((B * n_tiles, tn), jnp.float32)
        out_spec = pl.BlockSpec((1, tn), lambda b, t, order: (b * n_tiles + t, 0))

    grid_spec = pltpu.PrefetchScalarGridSpec(
        num_scalar_prefetch=1,                       # batch_order -> SMEM, index_maps
        grid=(B, n_tiles),
        in_specs=[
            pl.BlockSpec(memory_space=pltpu.MemorySpace.SMEM),            # alpha
            pl.BlockSpec((1, D, tn), lambda b, t, order: (b, 0, t)),      # X
            pl.BlockSpec((1, K, tn), lambda b, t, order: (order[b], 0, t)),  # gathered S
            pl.BlockSpec((D, K), lambda b, t, order: (0, 0)),             # Synthesis_Dict
            pl.BlockSpec((K, D), lambda b, t, order: (0, 0)),             # Analysis op
        ],
        out_specs=out_spec,
    )

    partials = pl.pallas_call(
        _make_kernel(N, tn, mask_cols),
        out_shape=out_shape,
        grid_spec=grid_spec,
        compiler_params=pltpu.CompilerParams(
            # All tiles independent -> shard across TensorCores (v7x megacore).
            dimension_semantics=("parallel", "parallel"),
            vmem_limit_bytes=32 * 1024 * 1024),      # headroom under v7x 64 MiB physical
    )(batch_order, alpha_arr, X, sparse_code, synthesis_dict, analysis_w)

    # Masked / padded columns contribute exactly 0, so a plain sum is exact.
    return jnp.sum(partials)


def sparse_loss_ref(X, sparse_code, synthesis_dict, analysis_w, batch_order, *, alpha):
    """Pure-JAX reference mirroring the PyTorch forward."""
    S_b = sparse_code[batch_order]                                   # [B, K, N]
    sparse_out = jnp.einsum('dk,bkn->bdn', synthesis_dict, S_b)      # [B, D, N]
    t1 = jnp.sum((X - sparse_out) ** 2)
    ax = jnp.einsum('kd,bdn->bkn', analysis_w, X)                    # [B, K, N]
    t2 = jnp.sum((ax - S_b) ** 2)
    t3 = jnp.sum(jnp.sqrt(jnp.sum(S_b ** 2, axis=1)))
    return t1 + alpha * (t2 + t3)


if __name__ == "__main__":
    # Small shapes consistent with the forward pass.  B=3 batch elements with
    # N=256 samples each -> grid (3, 1); the in-pipeline gather picks rows
    # 2, 0, 4 of sparse_code via the scalar-prefetched batch_order.
    B, D, N = 3, 32, 256      # batch, feature dim, samples per batch element
    M, K = 5, 64              # total sparse-code rows, dictionary atoms
    alpha = 0.1

    key = jax.random.PRNGKey(0)
    kx, ks, kd, ka = jax.random.split(key, 4)

    X = jax.random.normal(kx, (B, D, N), dtype=jnp.float32)
    sparse_code = jax.random.normal(ks, (M, K, N), dtype=jnp.float32) * 0.5
    synthesis_dict = jax.random.normal(kd, (D, K), dtype=jnp.float32) / jnp.sqrt(K)
    analysis_w = jax.random.normal(ka, (K, D), dtype=jnp.float32) / jnp.sqrt(D)
    batch_order = jnp.array([2, 0, 4], dtype=jnp.int32)

    out = sparse_loss(X, sparse_code, synthesis_dict, analysis_w, batch_order,
                      alpha=alpha)
    out = jax.block_until_ready(out)

    ref = sparse_loss_ref(X, sparse_code, synthesis_dict, analysis_w, batch_order,
                          alpha=alpha)
    assert jnp.allclose(out, ref, rtol=1e-4, atol=1e-3), (out, ref)

    print("KERNEL_OK")
</pallas_src>

<mosaic_0001>
module attributes {stable_mosaic.version = 11 : i64} {
  func.func @kernel(%arg0: i32, %arg1: i32, %arg2: memref<3xi32, #tpu.memory_space<smem>>, %arg3: memref<1xf32, #tpu.memory_space<smem>>, %arg4: memref<1x32x256xf32, #tpu.memory_space<vmem>>, %arg5: memref<1x64x256xf32, #tpu.memory_space<vmem>>, %arg6: memref<32x64xf32, #tpu.memory_space<vmem>>, %arg7: memref<64x32xf32, #tpu.memory_space<vmem>>, %arg8: memref<1x256xf32, #tpu.memory_space<vmem>>) attributes {dimension_semantics = [#tpu.dimension_semantics<parallel>, #tpu.dimension_semantics<parallel>], iteration_bounds = array<i64: 3, 1>, scalar_prefetch = 1 : i64, scratch_operands = 0 : i64, tpu.core_type = #tpu.core_type<tc>, window_params = [{transform_indices = @transform_0, window_bounds = array<i64: 1>}, {transform_indices = @transform_1, window_bounds = array<i64: 1, 32, 256>}, {transform_indices = @transform_2, window_bounds = array<i64: 1, 64, 256>}, {pipeline_mode = #tpu.pipeline_mode<synchronous>, transform_indices = @transform_3, window_bounds = array<i64: 32, 64>}, {pipeline_mode = #tpu.pipeline_mode<synchronous>, transform_indices = @transform_4, window_bounds = array<i64: 64, 32>}, {transform_indices = @transform_5, window_bounds = array<i64: 1, 256>}]} {
    %c0 = arith.constant 0 : index
    %0 = memref.load %arg3[%c0] : memref<1xf32, #tpu.memory_space<smem>>
    %c0_0 = arith.constant 0 : index
    %c0_1 = arith.constant 0 : index
    %c0_2 = arith.constant 0 : index
    %1 = vector.load %arg4[%c0_0, %c0_1, %c0_2] : memref<1x32x256xf32, #tpu.memory_space<vmem>>, vector<1x32x256xf32>
    %2 = vector.shape_cast %1 : vector<1x32x256xf32> to vector<32x256xf32>
    %c0_3 = arith.constant 0 : index
    %c0_4 = arith.constant 0 : index
    %c0_5 = arith.constant 0 : index
    %3 = vector.load %arg5[%c0_3, %c0_4, %c0_5] : memref<1x64x256xf32, #tpu.memory_space<vmem>>, vector<1x64x256xf32>
    %4 = vector.shape_cast %3 : vector<1x64x256xf32> to vector<64x256xf32>
    %c0_6 = arith.constant 0 : index
    %c0_7 = arith.constant 0 : index
    %5 = vector.load %arg7[%c0_6, %c0_7] : memref<64x32xf32, #tpu.memory_space<vmem>>, vector<64x32xf32>
    %cst = arith.constant dense<0.000000e+00> : vector<64x256xf32>
    %6 = tpu.matmul %5, %2, %cst {dimension_numbers = #tpu.dot_dimension_numbers<[1], [0], [0], [1], [0, 0, 1, 1], [], []>} : vector<64x32xf32>, vector<32x256xf32>, vector<64x256xf32> -> vector<64x256xf32>
    %7 = arith.subf %6, %4 : vector<64x256xf32>
    %8 = arith.mulf %7, %7 : vector<64x256xf32>
    %cst_8 = arith.constant dense<0.000000e+00> : vector<256xf32>
    %9 = vector.multi_reduction <add>, %8, %cst_8 [0] : vector<64x256xf32> to vector<256xf32>
    %10 = vector.shape_cast %9 : vector<256xf32> to vector<1x256xf32>
    %c0_9 = arith.constant 0 : index
    %c0_10 = arith.constant 0 : index
    %11 = vector.load %arg6[%c0_9, %c0_10] : memref<32x64xf32, #tpu.memory_space<vmem>>, vector<32x64xf32>
    %cst_11 = arith.constant dense<0.000000e+00> : vector<32x256xf32>
    %12 = tpu.matmul %11, %4, %cst_11 {dimension_numbers = #tpu.dot_dimension_numbers<[1], [0], [0], [1], [0, 0, 1, 1], [], []>} : vector<32x64xf32>, vector<64x256xf32>, vector<32x256xf32> -> vector<32x256xf32>
    %13 = arith.subf %2, %12 : vector<32x256xf32>
    %14 = arith.mulf %13, %13 : vector<32x256xf32>
    %cst_12 = arith.constant dense<0.000000e+00> : vector<256xf32>
    %15 = vector.multi_reduction <add>, %14, %cst_12 [0] : vector<32x256xf32> to vector<256xf32>
    %16 = vector.shape_cast %15 : vector<256xf32> to vector<1x256xf32>
    %17 = arith.mulf %4, %4 : vector<64x256xf32>
    %cst_13 = arith.constant dense<0.000000e+00> : vector<256xf32>
    %18 = vector.multi_reduction <add>, %17, %cst_13 [0] : vector<64x256xf32> to vector<256xf32>
    %19 = vector.shape_cast %18 : vector<256xf32> to vector<1x256xf32>
    %20 = math.sqrt %19 : vector<1x256xf32>
    %21 = arith.addf %10, %20 : vector<1x256xf32>
    %22 = vector.broadcast %0 : f32 to vector<1x256xf32>
    %23 = arith.mulf %22, %21 : vector<1x256xf32>
    %24 = arith.addf %16, %23 : vector<1x256xf32>
    %c0_14 = arith.constant 0 : index
    %c0_15 = arith.constant 0 : index
    %25 = vector.load %arg8[%c0_14, %c0_15] : memref<1x256xf32, #tpu.memory_space<vmem>>, vector<1x256xf32>
    tpu.vector_store %arg8[%c0_14, %c0_15], %24 {strides = array<i32>} : memref<1x256xf32, #tpu.memory_space<vmem>>, vector<1x256xf32>,
    return
  }
  func.func @transform_0(%arg0: i32, %arg1: i32, %arg2: memref<3xi32, #tpu.memory_space<smem>>) -> i32 {
    %c0_i32 = arith.constant 0 : i32
    %c0_i32_0 = arith.constant 0 : i32
    return %c0_i32 : i32
  }
  func.func @transform_1(%arg0: i32, %arg1: i32, %arg2: memref<3xi32, #tpu.memory_space<smem>>) -> (i32, i32, i32) {
    %c0_i32 = arith.constant 0 : i32
    %c0_i32_0 = arith.constant 0 : i32
    return %arg0, %c0_i32, %arg1 : i32, i32, i32
  }
  func.func @transform_2(%arg0: i32, %arg1: i32, %arg2: memref<3xi32, #tpu.memory_space<smem>>) -> (i32, i32, i32) {
    %0 = arith.index_cast %arg0 : i32 to index
    %1 = memref.load %arg2[%0] : memref<3xi32, #tpu.memory_space<smem>>
    %c0_i32 = arith.constant 0 : i32
    %c0_i32_0 = arith.constant 0 : i32
    return %1, %c0_i32, %arg1 : i32, i32, i32
  }
  func.func @transform_3(%arg0: i32, %arg1: i32, %arg2: memref<3xi32, #tpu.memory_space<smem>>) -> (i32, i32) {
    %c0_i32 = arith.constant 0 : i32
    %c0_i32_0 = arith.constant 0 : i32
    %c0_i32_1 = arith.constant 0 : i32
    return %c0_i32, %c0_i32_0 : i32, i32
  }
  func.func @transform_4(%arg0: i32, %arg1: i32, %arg2: memref<3xi32, #tpu.memory_space<smem>>) -> (i32, i32) {
    %c0_i32 = arith.constant 0 : i32
    %c0_i32_0 = arith.constant 0 : i32
    %c0_i32_1 = arith.constant 0 : i32
    return %c0_i32, %c0_i32_0 : i32, i32
  }
  func.func @transform_5(%arg0: i32, %arg1: i32, %arg2: memref<3xi32, #tpu.memory_space<smem>>) -> (i32, i32) {
    %c1_i32 = arith.constant 1 : i32
    %0 = arith.muli %arg0, %c1_i32 : i32
    %1 = arith.addi %0, %arg1 : i32
    %c0_i32 = arith.constant 0 : i32
    %c0_i32_0 = arith.constant 0 : i32
    return %c0_i32, %1 : i32, i32
  }
}

</mosaic_0001>

<llo_original>
// kernel: tpu_custom_call.1
$region0: #{tpu_custom_call.1}
  #allocation0 [shape = 'u32[]', space=smem, size = 0x4, offset = 0x4, fixed_abs, tag = 'smem constant byte address 0x4 - core index']
  #allocation1 [shape = 'u32[144,128]{1,0:T(1,128)}', space=vmem, size = 0x12000, scoped, tag = 'internal scratch']
  #allocation2 [shape = 's32[1]{0}', space=sflag, size = 0x4, scoped, tag = 'scoped memory for tpu_custom_call.1']
  #allocation3 [shape = 'u8[512]{0}', space=smem, size = 0x200, scoped, tag = 'prefetched SMEM operand 0']
  #allocation4 [shape = 'f32[1]{0:T(128)S(6)}', space=smem, size = 0x200, scoped, tag = 'scoped memory for tpu_custom_call.1']
  %s0 = inlined_call_operand.vmem [shape: s32[3], index: 0, kind: input, shape index: {}]
  %s1 = inlined_call_operand.<no memory space> [shape: f32[1], index: 1, kind: input, shape index: {}]
  %s2 = inlined_call_operand.hbm [shape: f32[3,32,256], index: 2, kind: input, shape index: {}]
  %s3 = inlined_call_operand.hbm [shape: f32[5,64,256], index: 3, kind: input, shape index: {}]
  %s4 = inlined_call_operand.vmem [shape: f32[32,64], index: 4, kind: input, shape index: {}]
  %s5 = inlined_call_operand.vmem [shape: f32[64,32], index: 5, kind: input, shape index: {}]
  %s6 = inlined_call_operand.hbm [shape: f32[1,768], index: 6, kind: output, shape index: {}]
  %s7 = sld [smem:[#allocation0]]
  $region61: #{tpu_custom_call.1} parent=0
    _
  %s9 = ssub.s32 1, %s7
  %s10 = scalar_select 0, %s9, %s7
  %s11 = sshll.u32 %s0, 4
  %s12 = int_to_ptr.vmem [resolvable:$true] %s11
  %14 = dma.vmem_to_smem %s12, 16, [#allocation3], [#allocation2]
  %15 = sst [smem:[#allocation4]] %s1
  %16 = dma.done [#allocation2], 16
  %17 = sfence
  $region1: #{tpu_custom_call.1} parent=0
    #allocation5 [shape = 'u8[65536]{0}', space=vmem, size = 0x10000, scoped, tag = 'input window, operand 2']
    #allocation6 [shape = 's32[2]{0}', space=sflag, size = 0x8, scoped, tag = 'scoped memory for tpu_custom_call.1']
    #allocation7 [shape = 's32[2]{0}', space=sflag, size = 0x8, scoped, tag = 'scoped memory for tpu_custom_call.1']
    #allocation8 [shape = 'u8[131072]{0}', space=vmem, size = 0x20000, scoped, tag = 'input window, operand 3']
    #allocation9 [shape = 's32[2]{0}', space=sflag, size = 0x8, scoped, tag = 'scoped memory for tpu_custom_call.1']
    #allocation10 [shape = 'u8[2048]{0}', space=vmem, size = 0x800, scoped, tag = 'output window, operand 0']
    %18 = vsyncpa [#allocation6], 0
    %s19 = scalar_lea.sflag [#allocation6], 1
    %20 = vsyncpa %s19, 0
    %21 = vsyncpa [#allocation9], 0
    %s22 = scalar_lea.sflag [#allocation9], 1
    %23 = vsyncpa %s22, 0
    %24 = vsyncpa [#allocation7], 0
    %s25 = scalar_lea.sflag [#allocation7], 1
    %26 = vsyncpa %s25, 0
    loop: start=0, step=1, limit=5
    $region2: #{tpu_custom_call.1} parent=1 // loop_pre_header
      _
    $region3: #{tpu_custom_call.1} parent=1 // loop_header
      %s28 = sphi 0, %s32
      %p29 = scmp.ge.s32.totalorder %s28, 5
      %s35 = sphi 0, %s47
      %s36 = sphi 0, %s43
      %s37 = sphi 0, %s35
      %s38 = sphi 0, %s36
      %s39 = sphi 0, %s37
      %s40 = sphi 0, %s38
      %s48 = sphi 0, %s48
      %s50 = sphi 0, %s48
      %s51 = sphi 0, %s50
      %s65 = sphi 0, %s51
      %s73 = sphi 0, %s75
      %s76 = sphi 0, %s73
      %s77 = sphi 0, %s76
      %s93 = sphi 0, %s77
      %s103 = sphi 0, %s105
      %s106 = sphi 0, %s103
      %s107 = sphi 0, %s106
      %s123 = sphi 0, %s107
      %s127 = sphi 0, %s127
      %s129 = sphi 0, %s127
      %s130 = sphi 0, %s129
      %s144 = sphi 0, %s130
      %s148 = sphi 0, %s148
      %s150 = sphi 0, %s148
      %s151 = sphi 0, %s150
      %s165 = sphi 0, %s151
      %s173 = sphi 0, %s175
      %s176 = sphi 0, %s173
      %s177 = sphi 0, %s176
      %s193 = sphi 0, %s177
    $region4: #{tpu_custom_call.1} parent=1 // loop_header_branch
      %31 = sbr.rel (%p29) target = $region8
    $region5: #{tpu_custom_call.1} parent=1 // loop_body
      %s33 = ssub.s32 %s28, 1
      %s34 = ssub.s32 %s28, 2
      %s41 = sadd.s32 1, %s36
      %p42 = scmp.ge.s32.totalorder %s41, 1
      %s43 = scalar_select %p42, 0, %s41
      %s44 = sadd.s32 1, %s35
      %s45 = scalar_select %p42, %s44, %s35
      %p46 = scmp.ge.s32.totalorder %s45, 3
      %s47 = scalar_select %p46, 0, %s45
      %s49 = sadd.s32 %s48, 1
      %p52 = scmp.eq.s32.totalorder %s28, 2
      %p53 = scmp.ne.s32.totalorder %s48, %s50
      %p54 = scmp.eq.s32.totalorder %s28, 0
      %p55 = por %p53, %p54
      %p56 = scmp.ne.s32.totalorder %s48, %s50
      %p57 = scmp.eq.s32.totalorder %s33, 2
      %p58 = por %p56, %p57
      %p59 = scmp.ne.s32.totalorder %s50, %s51
      %p60 = scmp.eq.s32.totalorder %s33, 0
      %p61 = por %p59, %p60
      %p62 = scmp.ne.s32.totalorder %s50, %s51
      %p63 = scmp.eq.s32.totalorder %s34, 2
      %p64 = por %p62, %p63
      %p66 = scmp.ne.s32.totalorder %s51, %s65
      %p67 = scmp.eq.s32.totalorder %s34, 0
      %p68 = por %p66, %p67
      %s69 = ssub.s32 %s35, %s47
      %s70 = ssub.s32 %s36, %s43
      %s71 = sor.u32 %s69, %s70
      %p72 = scmp.eq.s32.totalorder %s71, 0
      %s74 = sadd.s32 %s73, 1
      %s75 = scalar_select %p72, %s73, %s74
      %p78 = pneg %p72
      %p79 = scmp.eq.s32.totalorder %s28, 2
      %p80 = por %p78, %p79
      %p81 = scmp.ne.s32.totalorder %s73, %s76
      %p82 = scmp.eq.s32.totalorder %s28, 0
      %p83 = por %p81, %p82
      %p84 = scmp.ne.s32.totalorder %s73, %s76
      %p85 = scmp.eq.s32.totalorder %s33, 2
      %p86 = por %p84, %p85
      %p87 = scmp.ne.s32.totalorder %s76, %s77
      %p88 = scmp.eq.s32.totalorder %s33, 0
      %p89 = por %p87, %p88
      %p90 = scmp.ne.s32.totalorder %s76, %s77
      %p91 = scmp.eq.s32.totalorder %s34, 2
      %p92 = por %p90, %p91
      %p94 = scmp.ne.s32.totalorder %s77, %s93
      %p95 = scmp.eq.s32.totalorder %s34, 0
      %p96 = por %p94, %p95
      %s97 = sld [smem:[#allocation3 + %s35]]
      %s98 = sld [smem:[#allocation3 + %s47]]
      %s99 = ssub.s32 %s97, %s98
      %s100 = ssub.s32 %s36, %s43
      %s101 = sor.u32 %s99, %s100
      %p102 = scmp.eq.s32.totalorder %s101, 0
      %s104 = sadd.s32 %s103, 1
      %s105 = scalar_select %p102, %s103, %s104
      %p108 = pneg %p102
      %p109 = scmp.eq.s32.totalorder %s28, 2
      %p110 = por %p108, %p109
      %p111 = scmp.ne.s32.totalorder %s103, %s106
      %p112 = scmp.eq.s32.totalorder %s28, 0
      %p113 = por %p111, %p112
      %p114 = scmp.ne.s32.totalorder %s103, %s106
      %p115 = scmp.eq.s32.totalorder %s33, 2
      %p116 = por %p114, %p115
      %p117 = scmp.ne.s32.totalorder %s106, %s107
      %p118 = scmp.eq.s32.totalorder %s33, 0
      %p119 = por %p117, %p118
      %p120 = scmp.ne.s32.totalorder %s106, %s107
      %p121 = scmp.eq.s32.totalorder %s34, 2
      %p122 = por %p120, %p121
      %p124 = scmp.ne.s32.totalorder %s107, %s123
      %p125 = scmp.eq.s32.totalorder %s34, 0
      %p126 = por %p124, %p125
      %s128 = sadd.s32 %s127, 1
      %p131 = scmp.eq.s32.totalorder %s28, 2
      %p132 = scmp.ne.s32.totalorder %s127, %s129
      %p133 = scmp.eq.s32.totalorder %s28, 0
      %p134 = por %p132, %p133
      %p135 = scmp.ne.s32.totalorder %s127, %s129
      %p136 = scmp.eq.s32.totalorder %s33, 2
      %p137 = por %p135, %p136
      %p138 = scmp.ne.s32.totalorder %s129, %s130
      %p139 = scmp.eq.s32.totalorder %s33, 0
      %p140 = por %p138, %p139
      %p141 = scmp.ne.s32.totalorder %s129, %s130
      %p142 = scmp.eq.s32.totalorder %s34, 2
      %p143 = por %p141, %p142
      %p145 = scmp.ne.s32.totalorder %s130, %s144
      %p146 = scmp.eq.s32.totalorder %s34, 0
      %p147 = por %p145, %p146
      %s149 = sadd.s32 %s148, 1
      %p152 = scmp.eq.s32.totalorder %s28, 2
      %p153 = scmp.ne.s32.totalorder %s148, %s150
      %p154 = scmp.eq.s32.totalorder %s28, 0
      %p155 = por %p153, %p154
      %p156 = scmp.ne.s32.totalorder %s148, %s150
      %p157 = scmp.eq.s32.totalorder %s33, 2
      %p158 = por %p156, %p157
      %p159 = scmp.ne.s32.totalorder %s150, %s151
      %p160 = scmp.eq.s32.totalorder %s33, 0
      %p161 = por %p159, %p160
      %p162 = scmp.ne.s32.totalorder %s150, %s151
      %p163 = scmp.eq.s32.totalorder %s34, 2
      %p164 = por %p162, %p163
      %p166 = scmp.ne.s32.totalorder %s151, %s165
      %p167 = scmp.eq.s32.totalorder %s34, 0
      %p168 = por %p166, %p167
      %s169 = sadd.s32 %s35, %s36
      %s170 = sadd.s32 %s47, %s43
      %s171 = ssub.s32 %s169, %s170
      %p172 = scmp.eq.s32.totalorder %s171, 0
      %s174 = sadd.s32 %s173, 1
      %s175 = scalar_select %p172, %s173, %s174
      %p178 = pneg %p172
      %p179 = scmp.eq.s32.totalorder %s28, 2
      %p180 = por %p178, %p179
      %p181 = scmp.ne.s32.totalorder %s173, %s176
      %p182 = scmp.eq.s32.totalorder %s28, 0
      %p183 = por %p181, %p182
      %p184 = scmp.ne.s32.totalorder %s173, %s176
      %p185 = scmp.eq.s32.totalorder %s33, 2
      %p186 = por %p184, %p185
      %p187 = scmp.ne.s32.totalorder %s176, %s177
      %p188 = scmp.eq.s32.totalorder %s33, 0
      %p189 = por %p187, %p188
      %p190 = scmp.ne.s32.totalorder %s176, %s177
      %p191 = scmp.eq.s32.totalorder %s34, 2
      %p192 = por %p190, %p191
      %p194 = scmp.ne.s32.totalorder %s177, %s193
      %p195 = scmp.eq.s32.totalorder %s34, 0
      %p196 = por %p194, %p195
      %p197 = scmp.le.s32.totalorder 1, %s28
      %p198 = scmp.lt.s32.totalorder %s28, 4
      %p199 = pnand %p197, %p198
      %p200 = pneg %p199
      // Predicated region
      $region9: #{tpu_custom_call.1} parent=5 // pred_check
        _
      $region10: #{tpu_custom_call.1} parent=5 // pred_check_branch
        %202 = sbr.rel (%p199) target = $region12
      $region11: #{tpu_custom_call.1} parent=5 // pred_region
        %s203 = ssub.s32 %s28, 1
        // Predicated region
        $region13: #{tpu_custom_call.1} parent=11 // pred_check
          %p204 = pneg %p61
        $region14: #{tpu_custom_call.1} parent=11 // pred_check_branch
          %206 = sbr.rel (%p204) target = $region16
        $region15: #{tpu_custom_call.1} parent=11 // pred_region
          _
        $region16: #{tpu_custom_call.1} parent=11 // pred_fallthru
          _
        // Predicated region
        $region17: #{tpu_custom_call.1} parent=11 // pred_check
          %p207 = pneg %p140
        $region18: #{tpu_custom_call.1} parent=11 // pred_check_branch
          %209 = sbr.rel (%p207) target = $region20
        $region19: #{tpu_custom_call.1} parent=11 // pred_region
          _
        $region20: #{tpu_custom_call.1} parent=11 // pred_fallthru
          _
        // Predicated region
        $region21: #{tpu_custom_call.1} parent=11 // pred_check
          %p210 = pneg %p161
        $region22: #{tpu_custom_call.1} parent=11 // pred_check_branch
          %212 = sbr.rel (%p210) target = $region24
        $region23: #{tpu_custom_call.1} parent=11 // pred_region
          _
        $region24: #{tpu_custom_call.1} parent=11 // pred_fallthru
          _
      $region12: #{tpu_custom_call.1} parent=5 // pred_fallthru
        _
      %p213 = scmp.lt.s32.totalorder %s28, 3
      // Predicated region
      $region25: #{tpu_custom_call.1} parent=5 // pred_check
        %p214 = pneg %p213
      $region26: #{tpu_custom_call.1} parent=5 // pred_check_branch
        %216 = sbr.rel (%p214) target = $region28
      $region27: #{tpu_custom_call.1} parent=5 // pred_region
        // Predicated region
        $region29: #{tpu_custom_call.1} parent=27 // pred_check
          %p217 = pneg %p83
        $region30: #{tpu_custom_call.1} parent=27 // pred_check_branch
          %219 = sbr.rel (%p217) target = $region32
        $region31: #{tpu_custom_call.1} parent=27 // pred_region
          %s220 = sand.u32 %s73, 1
          %s221 = scalar_lea.sflag [#allocation6], %s220
          %s222 = sand.u32 %s73, 1
          %s223 = smul.addr %s222, 64
          %s224 = scalar_lea.vmem [#allocation5], %s223
          %s225 = smul.u32 2, %s36
          %s227 = ssub.s32 1024, 1024
          %228 = vsyncadd %s221, %s227
          %s229 = smul.addr %s35, 8
          %s230 = sadd.s32 %s225, %s229
          %s231 = smul.addr %s230, 128
          %s232 = scalar_lea.hbm %s2, %s231
          %s233 = sshll.u32 %s224, 4
          %s234 = int_to_ptr.vmem [resolvable:$true] %s233
          %239 = dma.hbm_to_vmem [thread:$0]  %s232, 1024, %s234, %s221, 256, 256, 16
        $region32: #{tpu_custom_call.1} parent=27 // pred_fallthru
          _
        // Predicated region
        $region33: #{tpu_custom_call.1} parent=27 // pred_check
          %p240 = pneg %p113
        $region34: #{tpu_custom_call.1} parent=27 // pred_check_branch
          %242 = sbr.rel (%p240) target = $region36
        $region35: #{tpu_custom_call.1} parent=27 // pred_region
          %s243 = sand.u32 %s103, 1
          %s244 = scalar_lea.sflag [#allocation9], %s243
          %s245 = sand.u32 %s103, 1
          %s246 = smul.addr %s245, 128
          %s247 = scalar_lea.vmem [#allocation8], %s246
          %s248 = sld [smem:[#allocation3 + %s35]]
          %s249 = smul.u32 2, %s36
          %s251 = ssub.s32 2048, 2048
          %252 = vsyncadd %s244, %s251
          %s253 = smul.addr %s248, 16
          %s254 = sadd.s32 %s249, %s253
          %s255 = smul.addr %s254, 128
          %s256 = scalar_lea.hbm %s3, %s255
          %s257 = sshll.u32 %s247, 4
          %s258 = int_to_ptr.vmem [resolvable:$true] %s257
          %263 = dma.hbm_to_vmem [thread:$0]  %s256, 2048, %s258, %s244, 256, 256, 16
        $region36: #{tpu_custom_call.1} parent=27 // pred_fallthru
          _
      $region28: #{tpu_custom_call.1} parent=5 // pred_fallthru
        _
      %p264 = scmp.le.s32.totalorder 1, %s28
      %p265 = scmp.lt.s32.totalorder %s28, 4
      %p266 = pnand %p264, %p265
      %p267 = pneg %p266
      // Predicated region
      $region37: #{tpu_custom_call.1} parent=5 // pred_check
        _
      $region38: #{tpu_custom_call.1} parent=5 // pred_check_branch
        %269 = sbr.rel (%p266) target = $region40
      $region39: #{tpu_custom_call.1} parent=5 // pred_region
        %s270 = ssub.s32 %s28, 1
        %s271 = sand.u32 %s76, 1
        %s272 = scalar_lea.sflag [#allocation6], %s271
        %s273 = sand.u32 %s76, 1
        %s274 = smul.addr %s273, 64
        %s275 = scalar_lea.vmem [#allocation5], %s274
        // Predicated region
        $region41: #{tpu_custom_call.1} parent=39 // pred_check
          %p276 = pneg %p89
        $region42: #{tpu_custom_call.1} parent=39 // pred_check_branch
          %278 = sbr.rel (%p276) target = $region44
        $region43: #{tpu_custom_call.1} parent=39 // pred_region
          %279 = dma.done %s272, 1024
        $region44: #{tpu_custom_call.1} parent=39 // pred_fallthru
          _
        %s280 = sand.u32 %s106, 1
        %s281 = scalar_lea.sflag [#allocation9], %s280
        %s282 = sand.u32 %s106, 1
        %s283 = smul.addr %s282, 128
        %s284 = scalar_lea.vmem [#allocation8], %s283
        // Predicated region
        $region45: #{tpu_custom_call.1} parent=39 // pred_check
          %p285 = pneg %p119
        $region46: #{tpu_custom_call.1} parent=39 // pred_check_branch
          %287 = sbr.rel (%p285) target = $region48
        $region47: #{tpu_custom_call.1} parent=39 // pred_region
          %288 = dma.done %s281, 2048
        $region48: #{tpu_custom_call.1} parent=39 // pred_fallthru
          _
        %p289 = pneg %p61
        %p290 = pneg %p58
        %s291 = sand.u32 %s76, 1
        %s292 = scalar_lea.sflag [#allocation6], %s291
        %s293 = sand.u32 %s76, 1
        %s294 = smul.addr %s293, 64
        %s295 = scalar_lea.vmem [#allocation5], %s294
        %p296 = pneg %p89
        %p297 = pneg %p86
        %s298 = sand.u32 %s106, 1
        %s299 = scalar_lea.sflag [#allocation9], %s298
        %s300 = sand.u32 %s106, 1
        %s301 = smul.addr %s300, 128
        %s302 = scalar_lea.vmem [#allocation8], %s301
        %p303 = pneg %p119
        %p304 = pneg %p116
        %p305 = pneg %p140
        %p306 = pneg %p137
        %p307 = pneg %p161
        %p308 = pneg %p158
        %p309 = pneg %p189
        %p310 = pneg %p186
        %s311 = sand.u32 %s176, 1
        %s312 = scalar_lea.sflag [#allocation7], %s311
        %s313 = sand.u32 %s176, 1
        %s314 = smul.addr %s313, 2
        %s315 = scalar_lea.vmem [#allocation10], %s314
        %s316 = smul.u32 2, %s38
        %s317 = sld [smem:[#allocation3 + %s37]]
        %s318 = smul.u32 2, %s38
        %s319 = sadd.s32 %s37, %s38
        %s320 = smul.u32 2, %s319
        %s321 = sld [smem:[#allocation4]]
        %v322 = vld [vmem:[%s275] sm:$0xff]
        %v323 = vld [vmem:[%s275 + $0x8] sm:$0xff]
        %v324 = vld [vmem:[%s275 + $0x10] sm:$0xff]
        %v325 = vld [vmem:[%s275 + $0x18] sm:$0xff]
        %v326 = vld [vmem:[%s275 + $0x20] sm:$0xff]
        %v327 = vld [vmem:[%s275 + $0x28] sm:$0xff]
        %v328 = vld [vmem:[%s275 + $0x30] sm:$0xff]
        %v329 = vld [vmem:[%s275 + $0x38] sm:$0xff]
        %v330 = vld [vmem:[%s284] sm:$0xff]
        %v331 = vld [vmem:[%s284 + $0x8] sm:$0xff]
        %v332 = vld [vmem:[%s284 + $0x10] sm:$0xff]
        %v333 = vld [vmem:[%s284 + $0x18] sm:$0xff]
        %v334 = vld [vmem:[%s284 + $0x20] sm:$0xff]
        %v335 = vld [vmem:[%s284 + $0x28] sm:$0xff]
        %v336 = vld [vmem:[%s284 + $0x30] sm:$0xff]
        %v337 = vld [vmem:[%s284 + $0x38] sm:$0xff]
        %v338 = vld [vmem:[%s284 + $0x40] sm:$0xff]
        %v339 = vld [vmem:[%s284 + $0x48] sm:$0xff]
        %v340 = vld [vmem:[%s284 + $0x50] sm:$0xff]
        %v341 = vld [vmem:[%s284 + $0x58] sm:$0xff]
        %v342 = vld [vmem:[%s284 + $0x60] sm:$0xff]
        %v343 = vld [vmem:[%s284 + $0x68] sm:$0xff]
        %v344 = vld [vmem:[%s284 + $0x70] sm:$0xff]
        %v345 = vld [vmem:[%s284 + $0x78] sm:$0xff]
        %v346 = vld [vmem:[%s5] sm:$0xff]
        %v347 = vld [vmem:[%s5 + $0x8] sm:$0xff]
        %v348 = vld [vmem:[%s5 + $0x10] sm:$0xff]
        %v349 = vld [vmem:[%s5 + $0x18] sm:$0xff]
        %v350 = vld [vmem:[%s5 + $0x20] sm:$0xff]
        %v351 = vld [vmem:[%s5 + $0x28] sm:$0xff]
        %v352 = vld [vmem:[%s5 + $0x30] sm:$0xff]
        %v353 = vld [vmem:[%s5 + $0x38] sm:$0xff]
        %vm354 = vcmask 261120
        %v356 = vsel %vm354, %v346, 0
        %v359 = vsel %vm354, %v347, 0
        %v362 = vsel %vm354, %v348, 0
        %v365 = vsel %vm354, %v349, 0
        %v368 = vsel %vm354, %v350, 0
        %v371 = vsel %vm354, %v351, 0
        %v374 = vsel %vm354, %v352, 0
        %v377 = vsel %vm354, %v353, 0
        %379 = vmatprep.subr.mxu0 0.0
        %380 = vmatpush1.msra.mxu0 0.0
        %381 = vmatprep.subr.mxu0 0.0
        %382 = vmatpush1.msra.mxu0 0.0
        %383 = vmatprep.subr.mxu0 0.0
        %384 = vmatpush1.msra.mxu0 0.0
        %385 = vmatprep.subr.mxu0 0.0
        %386 = vmatpush1.msra.mxu0 0.0
        %387 = vmatprep.subr.mxu0 0.0
        %388 = vmatpush1.msra.mxu0 0.0
        %389 = vmatprep.subr.mxu0 0.0
        %390 = vmatpush1.msra.mxu0 0.0
        %391 = vmatprep.subr.mxu0 0.0
        %392 = vmatpush1.msra.mxu0 0.0
        %393 = vmatprep.subr.mxu0 0.0
        %394 = vmatpush1.msra.mxu0 0.0
        %395 = vmatprep.subr.mxu0 0.0
        %396 = vmatpush1.msra.mxu0 0.0
        %397 = vmatprep.subr.mxu0 0.0
        %398 = vmatpush1.msra.mxu0 0.0
        %399 = vmatprep.subr.mxu0 0.0
        %400 = vmatpush1.msra.mxu0 0.0
        %401 = vmatprep.subr.mxu0 0.0
        %402 = vmatpush1.msra.mxu0 0.0
        %403 = vmatprep.subr.mxu0 %v329
        %404 = vmatpush1.msra.mxu0 %v328
        %405 = vmatprep.subr.mxu0 %v327
        %406 = vmatpush1.msra.mxu0 %v326
        %407 = vmatprep.subr.mxu0 %v325
        %408 = vmatpush1.msra.mxu0 %v324
        %409 = vmatprep.subr.mxu0 %v323
        %410 = vmatpush1.msra.mxu0 %v322
        %411 = vmatprep.subr.mxu0 0.0
        %412 = vmatpush2.msra.mxu0 0.0
        %413 = vmatprep.subr.mxu0 0.0
        %414 = vmatpush2.msra.mxu0 0.0
        %415 = vmatprep.subr.mxu0 0.0
        %416 = vmatpush2.msra.mxu0 0.0
        %417 = vmatprep.subr.mxu0 0.0
        %418 = vmatpush2.msra.mxu0 0.0
        %419 = vmatprep.subr.mxu0 0.0
        %420 = vmatpush2.msra.mxu0 0.0
        %421 = vmatprep.subr.mxu0 0.0
        %422 = vmatpush2.msra.mxu0 0.0
        %423 = vmatprep.subr.mxu0 0.0
        %424 = vmatpush2.msra.mxu0 0.0
        %425 = vmatprep.subr.mxu0 0.0
        %426 = vmatpush2.msra.mxu0 0.0
        %427 = vmatprep.subr.mxu0 0.0
        %428 = vmatpush2.msra.mxu0 0.0
        %429 = vmatprep.subr.mxu0 0.0
        %430 = vmatpush2.msra.mxu0 0.0
        %431 = vmatprep.subr.mxu0 0.0
        %432 = vmatpush2.msra.mxu0 0.0
        %433 = vmatprep.subr.mxu0 0.0
        %434 = vmatpush2.msra.mxu0 0.0
        %435 = vmatprep.subr.mxu0 0.0
        %436 = vmatpush2.msra.mxu0 0.0
        %437 = vmatprep.subr.mxu0 0.0
        %438 = vmatpush2.msra.mxu0 0.0
        %439 = vmatprep.subr.mxu0 0.0
        %440 = vmatpush2.msra.mxu0 0.0
        %441 = vmatprep.subr.mxu0 0.0
        %442 = vmatpush2.msra.mxu0 0.0
        %443 = vmatprep.mubr.f32.mxu0 0.0
        %444 = vmatmul.mubr.f32.gmra.mxu0 %v356
        %v445 = vpop.f32.mrf.mxu0
        %v446 = vadd.f32 0.0, %v445
        %v447 = vpop.f32.mrf.mxu0
        %v448 = vadd.f32 0.0, %v447
        %449 = vmatprep.mubr.f32.mxu0 0.0
        %450 = vmatmul.mubr.f32.gmra.mxu0 %v359
        %v451 = vpop.f32.mrf.mxu0
        %v452 = vadd.f32 0.0, %v451
        %v453 = vpop.f32.mrf.mxu0
        %v454 = vadd.f32 0.0, %v453
        %455 = vmatprep.mubr.f32.mxu0 0.0
        %456 = vmatmul.mubr.f32.gmra.mxu0 %v362
        %v457 = vpop.f32.mrf.mxu0
        %v458 = vadd.f32 0.0, %v457
        %v459 = vpop.f32.mrf.mxu0
        %v460 = vadd.f32 0.0, %v459
        %461 = vmatprep.mubr.f32.mxu0 0.0
        %462 = vmatmul.mubr.f32.gmra.mxu0 %v365
        %v463 = vpop.f32.mrf.mxu0
        %v464 = vadd.f32 0.0, %v463
        %v465 = vpop.f32.mrf.mxu0
        %v466 = vadd.f32 0.0, %v465
        %467 = vmatprep.mubr.f32.mxu0 0.0
        %468 = vmatmul.mubr.f32.gmra.mxu0 %v368
        %v469 = vpop.f32.mrf.mxu0
        %v470 = vadd.f32 0.0, %v469
        %v471 = vpop.f32.mrf.mxu0
        %v472 = vadd.f32 0.0, %v471
        %473 = vmatprep.mubr.f32.mxu0 0.0
        %474 = vmatmul.mubr.f32.gmra.mxu0 %v371
        %v475 = vpop.f32.mrf.mxu0
        %v476 = vadd.f32 0.0, %v475
        %v477 = vpop.f32.mrf.mxu0
        %v478 = vadd.f32 0.0, %v477
        %479 = vmatprep.mubr.f32.mxu0 0.0
        %480 = vmatmul.mubr.f32.gmra.mxu0 %v374
        %v481 = vpop.f32.mrf.mxu0
        %v482 = vadd.f32 0.0, %v481
        %v483 = vpop.f32.mrf.mxu0
        %v484 = vadd.f32 0.0, %v483
        %485 = vmatprep.mubr.f32.mxu0 0.0
        %486 = vmatmul.mubr.f32.gmra.mxu0 %v377
        %v487 = vpop.f32.mrf.mxu0
        %v488 = vadd.f32 0.0, %v487
        %v489 = vpop.f32.mrf.mxu0
        %v490 = vadd.f32 0.0, %v489
        %491 = vdwg.mxu0
        %v492 = vsub.f32 %v446, %v330
        %v493 = vsub.f32 %v448, %v331
        %v494 = vsub.f32 %v452, %v332
        %v495 = vsub.f32 %v454, %v333
        %v496 = vsub.f32 %v458, %v334
        %v497 = vsub.f32 %v460, %v335
        %v498 = vsub.f32 %v464, %v336
        %v499 = vsub.f32 %v466, %v337
        %v500 = vsub.f32 %v470, %v338
        %v501 = vsub.f32 %v472, %v339
        %v502 = vsub.f32 %v476, %v340
        %v503 = vsub.f32 %v478, %v341
        %v504 = vsub.f32 %v482, %v342
        %v505 = vsub.f32 %v484, %v343
        %v506 = vsub.f32 %v488, %v344
        %v507 = vsub.f32 %v490, %v345
        %v508 = vmul.f32 %v492, %v492
        %v509 = vmul.f32 %v493, %v493
        %v510 = vmul.f32 %v494, %v494
        %v511 = vmul.f32 %v495, %v495
        %v512 = vmul.f32 %v496, %v496
        %v513 = vmul.f32 %v497, %v497
        %v514 = vmul.f32 %v498, %v498
        %v515 = vmul.f32 %v499, %v499
        %v516 = vmul.f32 %v500, %v500
        %v517 = vmul.f32 %v501, %v501
        %v518 = vmul.f32 %v502, %v502
        %v519 = vmul.f32 %v503, %v503
        %v520 = vmul.f32 %v504, %v504
        %v521 = vmul.f32 %v505, %v505
        %v522 = vmul.f32 %v506, %v506
        %v523 = vmul.f32 %v507, %v507
        %v524 = vadd.f32 %v508, %v510
        %v525 = vadd.f32 %v524, %v512
        %v526 = vadd.f32 %v525, %v514
        %v527 = vadd.f32 %v526, %v516
        %v528 = vadd.f32 %v527, %v518
        %v529 = vadd.f32 %v528, %v520
        %v530 = vadd.f32 %v529, %v522
        %v531 = vrot.slane %v530, 4
        %v532 = vadd.f32 %v530, %v531
        %v533 = vrot.slane %v532, 2
        %v534 = vadd.f32 %v532, %v533
        %v535 = vrot.slane %v534, 1
        %v536 = vadd.f32 %v534, %v535
        %v537 = vadd.f32 %v509, %v511
        %v538 = vadd.f32 %v537, %v513
        %v539 = vadd.f32 %v538, %v515
        %v540 = vadd.f32 %v539, %v517
        %v541 = vadd.f32 %v540, %v519
        %v542 = vadd.f32 %v541, %v521
        %v543 = vadd.f32 %v542, %v523
        %v544 = vrot.slane %v543, 4
        %v545 = vadd.f32 %v543, %v544
        %v546 = vrot.slane %v545, 2
        %v547 = vadd.f32 %v545, %v546
        %v548 = vrot.slane %v547, 1
        %v549 = vadd.f32 %v547, %v548
        %v550 = vld [vmem:[%s4] sm:$0xff]
        %v551 = vld [vmem:[%s4 + $0x8] sm:$0xff]
        %v552 = vld [vmem:[%s4 + $0x10] sm:$0xff]
        %v553 = vld [vmem:[%s4 + $0x18] sm:$0xff]
        %vm554 = vcmask 523264
        %v556 = vsel %vm554, %v550, 0
        %v559 = vsel %vm554, %v551, 0
        %v562 = vsel %vm554, %v552, 0
        %v565 = vsel %vm554, %v553, 0
        %567 = vmatprep.subr.mxu0 0.0
        %568 = vmatpush1.msra.mxu0 0.0
        %569 = vmatprep.subr.mxu0 0.0
        %570 = vmatpush1.msra.mxu0 0.0
        %571 = vmatprep.subr.mxu0 0.0
        %572 = vmatpush1.msra.mxu0 0.0
        %573 = vmatprep.subr.mxu0 0.0
        %574 = vmatpush1.msra.mxu0 0.0
        %575 = vmatprep.subr.mxu0 0.0
        %576 = vmatpush1.msra.mxu0 0.0
        %577 = vmatprep.subr.mxu0 0.0
        %578 = vmatpush1.msra.mxu0 0.0
        %579 = vmatprep.subr.mxu0 0.0
        %580 = vmatpush1.msra.mxu0 0.0
        %581 = vmatprep.subr.mxu0 0.0
        %582 = vmatpush1.msra.mxu0 0.0
        %583 = vmatprep.subr.mxu0 %v345
        %584 = vmatpush1.msra.mxu0 %v344
        %585 = vmatprep.subr.mxu0 %v343
        %586 = vmatpush1.msra.mxu0 %v342
        %587 = vmatprep.subr.mxu0 %v341
        %588 = vmatpush1.msra.mxu0 %v340
        %589 = vmatprep.subr.mxu0 %v339
        %590 = vmatpush1.msra.mxu0 %v338
        %591 = vmatprep.subr.mxu0 %v337
        %592 = vmatpush1.msra.mxu0 %v336
        %593 = vmatprep.subr.mxu0 %v335
        %594 = vmatpush1.msra.mxu0 %v334
        %595 = vmatprep.subr.mxu0 %v333
        %596 = vmatpush1.msra.mxu0 %v332
        %597 = vmatprep.subr.mxu0 %v331
        %598 = vmatpush1.msra.mxu0 %v330
        %599 = vmatprep.subr.mxu0 0.0
        %600 = vmatpush2.msra.mxu0 0.0
        %601 = vmatprep.subr.mxu0 0.0
        %602 = vmatpush2.msra.mxu0 0.0
        %603 = vmatprep.subr.mxu0 0.0
        %604 = vmatpush2.msra.mxu0 0.0
        %605 = vmatprep.subr.mxu0 0.0
        %606 = vmatpush2.msra.mxu0 0.0
        %607 = vmatprep.subr.mxu0 0.0
        %608 = vmatpush2.msra.mxu0 0.0
        %609 = vmatprep.subr.mxu0 0.0
        %610 = vmatpush2.msra.mxu0 0.0
        %611 = vmatprep.subr.mxu0 0.0
        %612 = vmatpush2.msra.mxu0 0.0
        %613 = vmatprep.subr.mxu0 0.0
        %614 = vmatpush2.msra.mxu0 0.0
        %615 = vmatprep.subr.mxu0 0.0
        %616 = vmatpush2.msra.mxu0 0.0
        %617 = vmatprep.subr.mxu0 0.0
        %618 = vmatpush2.msra.mxu0 0.0
        %619 = vmatprep.subr.mxu0 0.0
        %620 = vmatpush2.msra.mxu0 0.0
        %621 = vmatprep.subr.mxu0 0.0
        %622 = vmatpush2.msra.mxu0 0.0
        %623 = vmatprep.subr.mxu0 0.0
        %624 = vmatpush2.msra.mxu0 0.0
        %625 = vmatprep.subr.mxu0 0.0
        %626 = vmatpush2.msra.mxu0 0.0
        %627 = vmatprep.subr.mxu0 0.0
        %628 = vmatpush2.msra.mxu0 0.0
        %629 = vmatprep.subr.mxu0 0.0
        %630 = vmatpush2.msra.mxu0 0.0
        %631 = vmatprep.mubr.f32.mxu0 0.0
        %632 = vmatmul.mubr.f32.gmra.mxu0 %v556
        %v633 = vpop.f32.mrf.mxu0
        %v634 = vadd.f32 0.0, %v633
        %v635 = vpop.f32.mrf.mxu0
        %v636 = vadd.f32 0.0, %v635
        %637 = vmatprep.mubr.f32.mxu0 0.0
        %638 = vmatmul.mubr.f32.gmra.mxu0 %v559
        %v639 = vpop.f32.mrf.mxu0
        %v640 = vadd.f32 0.0, %v639
        %v641 = vpop.f32.mrf.mxu0
        %v642 = vadd.f32 0.0, %v641
        %643 = vmatprep.mubr.f32.mxu0 0.0
        %644 = vmatmul.mubr.f32.gmra.mxu0 %v562
        %v645 = vpop.f32.mrf.mxu0
        %v646 = vadd.f32 0.0, %v645
        %v647 = vpop.f32.mrf.mxu0
        %v648 = vadd.f32 0.0, %v647
        %649 = vmatprep.mubr.f32.mxu0 0.0
        %650 = vmatmul.mubr.f32.gmra.mxu0 %v565
        %v651 = vpop.f32.mrf.mxu0
        %v652 = vadd.f32 0.0, %v651
        %v653 = vpop.f32.mrf.mxu0
        %v654 = vadd.f32 0.0, %v653
        %655 = vdwg.mxu0
        %v656 = vsub.f32 %v322, %v634
        %v657 = vsub.f32 %v323, %v636
        %v658 = vsub.f32 %v324, %v640
        %v659 = vsub.f32 %v325, %v642
        %v660 = vsub.f32 %v326, %v646
        %v661 = vsub.f32 %v327, %v648
        %v662 = vsub.f32 %v328, %v652
        %v663 = vsub.f32 %v329, %v654
        %v664 = vmul.f32 %v656, %v656
        %v665 = vmul.f32 %v657, %v657
        %v666 = vmul.f32 %v658, %v658
        %v667 = vmul.f32 %v659, %v659
        %v668 = vmul.f32 %v660, %v660
        %v669 = vmul.f32 %v661, %v661
        %v670 = vmul.f32 %v662, %v662
        %v671 = vmul.f32 %v663, %v663
        %v672 = vadd.f32 %v664, %v666
        %v673 = vadd.f32 %v672, %v668
        %v674 = vadd.f32 %v673, %v670
        %v675 = vrot.slane %v674, 4
        %v676 = vadd.f32 %v674, %v675
        %v677 = vrot.slane %v676, 2
        %v678 = vadd.f32 %v676, %v677
        %v679 = vrot.slane %v678, 1
        %v680 = vadd.f32 %v678, %v679
        %v681 = vadd.f32 %v665, %v667
        %v682 = vadd.f32 %v681, %v669
        %v683 = vadd.f32 %v682, %v671
        %v684 = vrot.slane %v683, 4
        %v685 = vadd.f32 %v683, %v684
        %v686 = vrot.slane %v685, 2
        %v687 = vadd.f32 %v685, %v686
        %v688 = vrot.slane %v687, 1
        %v689 = vadd.f32 %v687, %v688
        %v690 = vmul.f32 %v330, %v330
        %v691 = vmul.f32 %v331, %v331
        %v692 = vmul.f32 %v332, %v332
        %v693 = vmul.f32 %v333, %v333
        %v694 = vmul.f32 %v334, %v334
        %v695 = vmul.f32 %v335, %v335
        %v696 = vmul.f32 %v336, %v336
        %v697 = vmul.f32 %v337, %v337
        %v698 = vmul.f32 %v338, %v338
        %v699 = vmul.f32 %v339, %v339
        %v700 = vmul.f32 %v340, %v340
        %v701 = vmul.f32 %v341, %v341
        %v702 = vmul.f32 %v342, %v342
        %v703 = vmul.f32 %v343, %v343
        %v704 = vmul.f32 %v344, %v344
        %v705 = vmul.f32 %v345, %v345
        %v706 = vadd.f32 %v690, %v692
        %v707 = vadd.f32 %v706, %v694
        %v708 = vadd.f32 %v707, %v696
        %v709 = vadd.f32 %v708, %v698
        %v710 = vadd.f32 %v709, %v700
        %v711 = vadd.f32 %v710, %v702
        %v712 = vadd.f32 %v711, %v704
        %v713 = vrot.slane %v712, 4
        %v714 = vadd.f32 %v712, %v713
        %v715 = vrot.slane %v714, 2
        %v716 = vadd.f32 %v714, %v715
        %v717 = vrot.slane %v716, 1
        %v718 = vadd.f32 %v716, %v717
        %v719 = vadd.f32 %v691, %v693
        %v720 = vadd.f32 %v719, %v695
        %v721 = vadd.f32 %v720, %v697
        %v722 = vadd.f32 %v721, %v699
        %v723 = vadd.f32 %v722, %v701
        %v724 = vadd.f32 %v723, %v703
        %v725 = vadd.f32 %v724, %v705
        %v726 = vrot.slane %v725, 4
        %v727 = vadd.f32 %v725, %v726
        %v728 = vrot.slane %v727, 2
        %v729 = vadd.f32 %v727, %v728
        %v730 = vrot.slane %v729, 1
        %v731 = vadd.f32 %v729, %v730
        %v732 = vrsqrt.pop %v718
        %v733 = vmul.f32 %v718, %v732
        %vm734 = vcmp.eq.f32.partialorder %v718, inf
        %v735 = vsel %vm734, %v718, %v733
        %vm736 = vcmp.eq.f32.partialorder %v718, 0.0
        %v737 = vand.u32 %v718, 2147483648
        %v738 = vsel %vm736, %v737, %v735
        %v739 = vrsqrt.pop %v731
        %v740 = vmul.f32 %v731, %v739
        %vm741 = vcmp.eq.f32.partialorder %v731, inf
        %v742 = vsel %vm741, %v731, %v740
        %vm743 = vcmp.eq.f32.partialorder %v731, 0.0
        %v744 = vand.u32 %v731, 2147483648
        %v745 = vsel %vm743, %v744, %v742
        %v746 = vadd.f32 %v536, %v738
        %v747 = vadd.f32 %v549, %v745
        %v748 = vstv %s321
        %v749 = vmul.f32 %v748, %v746
        %v750 = vmul.f32 %v748, %v747
        %v751 = vadd.f32 %v680, %v749
        %v752 = vadd.f32 %v689, %v750
        %v755 = vcombine.low %v751, %v752
        %v757 = vunpack.c.l.s4 1966171168
        %v758 = vunpack.c.0.s8 %v757
        %v759 = vlaneseq
        %v760 = vshrl.u32 %v759, 7
        %v761 = vsub.s32 %v758, %v760
        %v762 = vrot.slane %v755, %v761
        %v764 = vunpack.c.l.s4 1966171168
        %v765 = vunpack.c.0.s8 %v764
        %v766 = vlaneseq
        %v767 = vshrl.u32 %v766, 7
        %v768 = vsub.s32 %v765, %v767
        %v769 = vrot.slane %v762, %v768
        %v771 = vlaneseq
        %vm772 = vcmp.ge.s32.totalorder %v771, 0
        %vm773 = vcmp.lt.s32.totalorder %v771, 256
        %vm774 = vmand %vm772, %vm773
        %775 = vst.msk [vmem:[%s315] sm:$0x3] %vm774, %v769
        %s776 = sand.u32 %s176, 1
        %s777 = scalar_lea.sflag [#allocation7], %s776
        %s778 = sand.u32 %s176, 1
        %s779 = smul.addr %s778, 2
        %s780 = scalar_lea.vmem [#allocation10], %s779
        // Predicated region
        $region49: #{tpu_custom_call.1} parent=39 // pred_check
          %p781 = pneg %p186
        $region50: #{tpu_custom_call.1} parent=39 // pred_check_branch
          %783 = sbr.rel (%p781) target = $region52
        $region51: #{tpu_custom_call.1} parent=39 // pred_region
          %s784 = sadd.s32 %s37, %s38
          %s785 = smul.u32 2, %s784
          %s787 = ssub.s32 32, 32
          %788 = vsyncadd %s777, %s787
          %s789 = smul.addr %s785, 16
          %s790 = scalar_lea.hbm %s6, %s789
          %s792 = sshll.u32 %s780, 4
          %s793 = int_to_ptr.vmem [resolvable:$true] %s792
          %795 = dma.vmem_to_hbm [thread:$0]  %s793, 32, %s790, %s777
        $region52: #{tpu_custom_call.1} parent=39 // pred_fallthru
          _
      $region40: #{tpu_custom_call.1} parent=5 // pred_fallthru
        _
      %p796 = scmp.le.s32.totalorder 2, %s28
      // Predicated region
      $region53: #{tpu_custom_call.1} parent=5 // pred_check
        %p797 = pneg %p796
      $region54: #{tpu_custom_call.1} parent=5 // pred_check_branch
        %799 = sbr.rel (%p797) target = $region56
      $region55: #{tpu_custom_call.1} parent=5 // pred_region
        %s800 = ssub.s32 %s28, 2
        // Predicated region
        $region57: #{tpu_custom_call.1} parent=55 // pred_check
          %p801 = pneg %p192
        $region58: #{tpu_custom_call.1} parent=55 // pred_check_branch
          %803 = sbr.rel (%p801) target = $region60
        $region59: #{tpu_custom_call.1} parent=55 // pred_region
          %s804 = sand.u32 %s177, 1
          %s805 = scalar_lea.sflag [#allocation7], %s804
          %s806 = sand.u32 %s177, 1
          %s807 = smul.addr %s806, 2
          %s808 = scalar_lea.vmem [#allocation10], %s807
          %809 = dma.done %s805, 32
        $region60: #{tpu_custom_call.1} parent=55 // pred_fallthru
          _
      $region56: #{tpu_custom_call.1} parent=5 // pred_fallthru
        _
    $region6: #{tpu_custom_call.1} parent=1 // loop_footer
      %s32 = sadd.s32 1, %s28
    $region7: #{tpu_custom_call.1} parent=1 // loop_footer_branch
      %27 = sbr.rel target = $region3
    $region8: #{tpu_custom_call.1} parent=1 // loop_exit
      _
    %810 = vsyncpa [#allocation6], 1
    %s811 = scalar_lea.sflag [#allocation6], 1
    %812 = vsyncpa %s811, 1
    %813 = vsyncpa [#allocation9], 1
    %s814 = scalar_lea.sflag [#allocation9], 1
    %815 = vsyncpa %s814, 1
    %816 = vsyncpa [#allocation7], 1
    %s817 = scalar_lea.sflag [#allocation7], 1
    %818 = vsyncpa %s817, 1

</llo_original>
